<compile_context>
chip_gen: v7x
topology: tpu7x:2x2x1
jax: 0.10.0
libtpu: 0.0.40
codegen_flags: <defaults>
</compile_context>

<pallas_src>
import functools

import jax
import jax.numpy as jnp
from jax import lax
from jax.experimental import pallas as pl
from jax.experimental.pallas import tpu as pltpu


def _make_spatial_attention_kernel(ksize: int, C: int):
    pad = 3 if ksize == 7 else 1

    def kernel(x_ref, w_ref, o_ref, sum_ref, max_ref, feat_ref):
        # x_ref:    (TC, H, W)   native dtype, one channel chunk of one batch element
        # w_ref:    (2*k*k,)     SMEM f32, conv weight flattened from OIHW (O=1)
        # o_ref:    (H, W)       output spatial map for this batch element
        # sum_ref:  (H, W) f32   scratch, running channel sum
        # max_ref:  (H, W) f32   scratch, running channel max
        # feat_ref: (2, H+2p, W+2p) f32 scratch, zero-padded [mean, max] maps
        TC, H, W = x_ref.shape
        c_idx = pl.program_id(1)
        n_c = pl.num_programs(1)

        @pl.when(c_idx == 0)
        def _init():
            sum_ref[...] = jnp.zeros_like(sum_ref)
            max_ref[...] = jnp.full(max_ref.shape, -jnp.inf, dtype=max_ref.dtype)

        # Stream channels one (H, W) slice at a time: the live f32 temporary is a single
        # spatial slice, never a C-sized block (no spills at C=128..512).
        def chan_body(ci, carry):
            xf = x_ref[ci].astype(jnp.float32)                     # (H, W)
            sum_ref[...] = sum_ref[...] + xf
            max_ref[...] = jnp.maximum(max_ref[...], xf)
            return carry

        lax.fori_loop(0, TC, chan_body, 0, unroll=True)

        @pl.when(c_idx == n_c - 1)
        def _finalize():
            Hp = H + 2 * pad
            Wp = W + 2 * pad

            # Zero only the halo border (runs once per output map, not per channel step;
            # the interior is fully overwritten right below).
            zrow = jnp.zeros((2, pad, Wp), jnp.float32)
            feat_ref[:, 0:pad, :] = zrow
            feat_ref[:, pad + H:, :] = zrow
            zcol = jnp.zeros((2, Hp, pad), jnp.float32)
            feat_ref[:, :, 0:pad] = zcol
            feat_ref[:, :, pad + W:] = zcol

            # Implicit concat([mean, max]) written straight into the padded scratch.
            feat_ref[0, pad:pad + H, pad:pad + W] = sum_ref[...] * (1.0 / C)
            feat_ref[1, pad:pad + H, pad:pad + W] = max_ref[...]

            # k x k conv, 2 in-channels -> 1 out-channel, no bias (VPU taps).
            # One VMEM load per (in-channel, ky) row band; kx taps are in-register
            # lane shifts of that band (XLU), not extra unaligned loads.
            acc = jnp.zeros((H, W), jnp.float32)
            for ic in range(2):
                for ky in range(ksize):
                    band = feat_ref[ic, ky:ky + H, :]              # (H, W + 2*pad)
                    for kx in range(ksize):
                        tap = lax.slice_in_dim(band, kx, kx + W, axis=1)   # (H, W)
                        acc = acc + tap * w_ref[(ic * ksize + ky) * ksize + kx]

            o_ref[...] = acc.astype(o_ref.dtype)

    return kernel


@functools.partial(jax.jit, static_argnames=("kernel_size", "channel_chunk"))
def spatial_attention_forward(x, w, kernel_size=3, channel_chunk=None):
    """x: (B, C, H, W) NCHW; w: (1, 2, k, k) conv weight (no bias). Returns (B, 1, H, W)."""
    assert kernel_size in (3, 7), "kernel size must be 3 or 7"
    B, C, H, W = x.shape
    pad = 3 if kernel_size == 7 else 1

    if channel_chunk is None:
        channel_chunk = next(d for d in (8, 4, 2, 1) if C % d == 0)
    TC = channel_chunk
    assert C % TC == 0, "channel_chunk must divide C"
    nC = C // TC

    w_flat = w.reshape(-1).astype(jnp.float32)                     # (2*k*k,) -> SMEM

    # Explicit scoped-VMEM budget for the chosen tiles (leave headroom on v7x's 64 MiB).
    itemsize = jnp.dtype(x.dtype).itemsize
    x_block_bytes = TC * H * W * itemsize
    out_block_bytes = H * W * itemsize
    scratch_bytes = (2 * (H + 2 * pad) * (W + 2 * pad) + 2 * H * W) * 4
    vmem_limit = int(min(64 * 1024 * 1024,
                         max(32 * 1024 * 1024,
                             2 * (x_block_bytes + out_block_bytes)
                             + scratch_bytes + (8 << 20))))

    kernel = _make_spatial_attention_kernel(kernel_size, C)
    return pl.pallas_call(
        kernel,
        out_shape=jax.ShapeDtypeStruct((B, 1, H, W), x.dtype),
        grid=(B, nC),
        in_specs=[
            pl.BlockSpec((None, TC, H, W), lambda b, c: (b, c, 0, 0)),
            pl.BlockSpec(memory_space=pltpu.MemorySpace.SMEM),
        ],
        out_specs=pl.BlockSpec((None, None, H, W), lambda b, c: (b, 0, 0, 0)),
        scratch_shapes=[
            pltpu.VMEM((H, W), jnp.float32),                       # channel-sum accumulator
            pltpu.VMEM((H, W), jnp.float32),                       # channel-max accumulator
            pltpu.VMEM((2, H + 2 * pad, W + 2 * pad), jnp.float32),  # padded [mean, max]
        ],
        compiler_params=pltpu.CompilerParams(
            dimension_semantics=("parallel", "arbitrary"),
            vmem_limit_bytes=vmem_limit),
    )(x, w_flat)


def _reference(x, w, kernel_size):
    pad = 3 if kernel_size == 7 else 1
    feat = jnp.concatenate(
        [jnp.mean(x, axis=1, keepdims=True), jnp.max(x, axis=1, keepdims=True)],
        axis=1)
    return lax.conv_general_dilated(
        feat, w, window_strides=(1, 1), padding=[(pad, pad), (pad, pad)],
        dimension_numbers=("NCHW", "OIHW", "NCHW"))


if __name__ == "__main__":
    key = jax.random.PRNGKey(0)

    # Config A: kernel_size=3, small CBAM-style shape, 2 channel chunks (exercises the
    # grid reduction axis / accumulator reset + finalize path).
    B, C, H, W = 2, 4, 16, 16
    kx, kw, key = jax.random.split(key, 3)
    x = jax.random.normal(kx, (B, C, H, W), jnp.float32)
    w = jax.random.normal(kw, (1, 2, 3, 3), jnp.float32) * 0.3
    out = jax.block_until_ready(
        spatial_attention_forward(x, w, kernel_size=3, channel_chunk=2))
    ref = _reference(x, w, 3)
    assert out.shape == (B, 1, H, W), out.shape
    err = float(jnp.max(jnp.abs(out - ref)))
    assert err < 1e-4, f"k=3 max abs error {err}"

    # Config B: kernel_size=7 (pad=3), a few more channels, chunked reduction.
    B2, C2, H2, W2 = 2, 8, 20, 20
    kx2, kw2, key = jax.random.split(key, 3)
    x2 = jax.random.normal(kx2, (B2, C2, H2, W2), jnp.float32)
    w2 = jax.random.normal(kw2, (1, 2, 7, 7), jnp.float32) * 0.1
    out2 = jax.block_until_ready(
        spatial_attention_forward(x2, w2, kernel_size=7, channel_chunk=4))
    ref2 = _reference(x2, w2, 7)
    assert out2.shape == (B2, 1, H2, W2), out2.shape
    err2 = float(jnp.max(jnp.abs(out2 - ref2)))
    assert err2 < 1e-4, f"k=7 max abs error {err2}"

    print("KERNEL_OK")
</pallas_src>

<mosaic_0001>
module attributes {stable_mosaic.version = 11 : i64} {
  func.func @kernel(%arg0: i32, %arg1: i32, %arg2: memref<1x2x16x16xf32, #tpu.memory_space<vmem>>, %arg3: memref<18xf32, #tpu.memory_space<smem>>, %arg4: memref<1x1x16x16xf32, #tpu.memory_space<vmem>>, %arg5: memref<16x16xf32, #tpu.memory_space<vmem>>, %arg6: memref<16x16xf32, #tpu.memory_space<vmem>>, %arg7: memref<2x18x18xf32, #tpu.memory_space<vmem>>) attributes {dimension_semantics = [#tpu.dimension_semantics<parallel>, #tpu.dimension_semantics<arbitrary>], iteration_bounds = array<i64: 2, 2>, scalar_prefetch = 0 : i64, scratch_operands = 3 : i64, tpu.core_type = #tpu.core_type<tc>, window_params = [{transform_indices = @transform_0, window_bounds = array<i64: 1, 2, 16, 16>}, {transform_indices = @transform_1, window_bounds = array<i64: 18>}, {transform_indices = @transform_2, window_bounds = array<i64: 1, 1, 16, 16>}]} {
    %c0_i32 = arith.constant 0 : i32
    %0 = arith.cmpi eq, %arg1, %c0_i32 : i32
    %1 = arith.extui %0 : i1 to i32
    %c0_i32_0 = arith.constant 0 : i32
    %2 = arith.cmpi ne, %1, %c0_i32_0 : i32
    scf.if %2 {
      %cst = arith.constant 0.000000e+00 : f32
      %24 = vector.broadcast %cst : f32 to vector<16x16xf32>
      %c0_25 = arith.constant 0 : index
      %c0_26 = arith.constant 0 : index
      %25 = vector.load %arg5[%c0_25, %c0_26] : memref<16x16xf32, #tpu.memory_space<vmem>>, vector<16x16xf32>
      tpu.vector_store %arg5[%c0_25, %c0_26], %24 {strides = array<i32>} : memref<16x16xf32, #tpu.memory_space<vmem>>, vector<16x16xf32>,
      %cst_27 = arith.constant 0xFF800000 : f32
      %26 = vector.broadcast %cst_27 : f32 to vector<16x16xf32>
      %c0_28 = arith.constant 0 : index
      %c0_29 = arith.constant 0 : index
      %27 = vector.load %arg6[%c0_28, %c0_29] : memref<16x16xf32, #tpu.memory_space<vmem>>, vector<16x16xf32>
      tpu.vector_store %arg6[%c0_28, %c0_29], %26 {strides = array<i32>} : memref<16x16xf32, #tpu.memory_space<vmem>>, vector<16x16xf32>,
    } else {
    }
    %c0_i32_1 = arith.constant 0 : i32
    %c0 = arith.constant 0 : index
    %3 = arith.index_cast %c0_i32_1 : i32 to index
    %c0_2 = arith.constant 0 : index
    %c0_3 = arith.constant 0 : index
    %4 = vector.load %arg2[%c0, %3, %c0_2, %c0_3] : memref<1x2x16x16xf32, #tpu.memory_space<vmem>>, vector<1x1x16x16xf32>
    %5 = vector.shape_cast %4 : vector<1x1x16x16xf32> to vector<16x16xf32>
    %c0_4 = arith.constant 0 : index
    %c0_5 = arith.constant 0 : index
    %6 = vector.load %arg5[%c0_4, %c0_5] : memref<16x16xf32, #tpu.memory_space<vmem>>, vector<16x16xf32>
    %7 = arith.addf %6, %5 : vector<16x16xf32>
    %c0_6 = arith.constant 0 : index
    %c0_7 = arith.constant 0 : index
    %8 = vector.load %arg5[%c0_6, %c0_7] : memref<16x16xf32, #tpu.memory_space<vmem>>, vector<16x16xf32>
    tpu.vector_store %arg5[%c0_6, %c0_7], %7 {strides = array<i32>} : memref<16x16xf32, #tpu.memory_space<vmem>>, vector<16x16xf32>,
    %c0_8 = arith.constant 0 : index
    %c0_9 = arith.constant 0 : index
    %9 = vector.load %arg6[%c0_8, %c0_9] : memref<16x16xf32, #tpu.memory_space<vmem>>, vector<16x16xf32>
    %10 = arith.maximumf %9, %5 : vector<16x16xf32>
    %c0_10 = arith.constant 0 : index
    %c0_11 = arith.constant 0 : index
    %11 = vector.load %arg6[%c0_10, %c0_11] : memref<16x16xf32, #tpu.memory_space<vmem>>, vector<16x16xf32>
    tpu.vector_store %arg6[%c0_10, %c0_11], %10 {strides = array<i32>} : memref<16x16xf32, #tpu.memory_space<vmem>>, vector<16x16xf32>,
    %c1_i32 = arith.constant 1 : i32
    %c0_12 = arith.constant 0 : index
    %12 = arith.index_cast %c1_i32 : i32 to index
    %c0_13 = arith.constant 0 : index
    %c0_14 = arith.constant 0 : index
    %13 = vector.load %arg2[%c0_12, %12, %c0_13, %c0_14] : memref<1x2x16x16xf32, #tpu.memory_space<vmem>>, vector<1x1x16x16xf32>
    %14 = vector.shape_cast %13 : vector<1x1x16x16xf32> to vector<16x16xf32>
    %c0_15 = arith.constant 0 : index
    %c0_16 = arith.constant 0 : index
    %15 = vector.load %arg5[%c0_15, %c0_16] : memref<16x16xf32, #tpu.memory_space<vmem>>, vector<16x16xf32>
    %16 = arith.addf %15, %14 : vector<16x16xf32>
    %c0_17 = arith.constant 0 : index
    %c0_18 = arith.constant 0 : index
    %17 = vector.load %arg5[%c0_17, %c0_18] : memref<16x16xf32, #tpu.memory_space<vmem>>, vector<16x16xf32>
    tpu.vector_store %arg5[%c0_17, %c0_18], %16 {strides = array<i32>} : memref<16x16xf32, #tpu.memory_space<vmem>>, vector<16x16xf32>,
    %c0_19 = arith.constant 0 : index
    %c0_20 = arith.constant 0 : index
    %18 = vector.load %arg6[%c0_19, %c0_20] : memref<16x16xf32, #tpu.memory_space<vmem>>, vector<16x16xf32>
    %19 = arith.maximumf %18, %14 : vector<16x16xf32>
    %c0_21 = arith.constant 0 : index
    %c0_22 = arith.constant 0 : index
    %20 = vector.load %arg6[%c0_21, %c0_22] : memref<16x16xf32, #tpu.memory_space<vmem>>, vector<16x16xf32>
    tpu.vector_store %arg6[%c0_21, %c0_22], %19 {strides = array<i32>} : memref<16x16xf32, #tpu.memory_space<vmem>>, vector<16x16xf32>,
    %c2_i32 = arith.constant 2 : i32
    %c1_i32_23 = arith.constant 1 : i32
    %21 = arith.cmpi eq, %arg1, %c1_i32_23 : i32
    %22 = arith.extui %21 : i1 to i32
    %c0_i32_24 = arith.constant 0 : i32
    %23 = arith.cmpi ne, %22, %c0_i32_24 : i32
    scf.if %23 {
      %cst = arith.constant 0.000000e+00 : f32
      %24 = vector.broadcast %cst : f32 to vector<2x1x18xf32>
      %c0_25 = arith.constant 0 : index
      %c0_26 = arith.constant 0 : index
      %c0_27 = arith.constant 0 : index
      %25 = vector.load %arg7[%c0_25, %c0_26, %c0_27] : memref<2x18x18xf32, #tpu.memory_space<vmem>>, vector<2x1x18xf32>
      tpu.vector_store %arg7[%c0_25, %c0_26, %c0_27], %24 {strides = array<i32>} : memref<2x18x18xf32, #tpu.memory_space<vmem>>, vector<2x1x18xf32>,
      %c0_28 = arith.constant 0 : index
      %c17 = arith.constant 17 : index
      %c0_29 = arith.constant 0 : index
      %26 = vector.load %arg7[%c0_28, %c17, %c0_29] : memref<2x18x18xf32, #tpu.memory_space<vmem>>, vector<2x1x18xf32>
      tpu.vector_store %arg7[%c0_28, %c17, %c0_29], %24 {strides = array<i32>} : memref<2x18x18xf32, #tpu.memory_space<vmem>>, vector<2x1x18xf32>,
      %cst_30 = arith.constant 0.000000e+00 : f32
      %27 = vector.broadcast %cst_30 : f32 to vector<2x18x1xf32>
      %c0_31 = arith.constant 0 : index
      %c0_32 = arith.constant 0 : index
      %c0_33 = arith.constant 0 : index
      %28 = vector.load %arg7[%c0_31, %c0_32, %c0_33] : memref<2x18x18xf32, #tpu.memory_space<vmem>>, vector<2x18x1xf32>
      tpu.vector_store %arg7[%c0_31, %c0_32, %c0_33], %27 {strides = array<i32>} : memref<2x18x18xf32, #tpu.memory_space<vmem>>, vector<2x18x1xf32>,
      %c0_34 = arith.constant 0 : index
      %c0_35 = arith.constant 0 : index
      %c17_36 = arith.constant 17 : index
      %29 = vector.load %arg7[%c0_34, %c0_35, %c17_36] : memref<2x18x18xf32, #tpu.memory_space<vmem>>, vector<2x18x1xf32>
      tpu.vector_store %arg7[%c0_34, %c0_35, %c17_36], %27 {strides = array<i32>} : memref<2x18x18xf32, #tpu.memory_space<vmem>>, vector<2x18x1xf32>,
      %c0_37 = arith.constant 0 : index
      %c0_38 = arith.constant 0 : index
      %30 = vector.load %arg5[%c0_37, %c0_38] : memref<16x16xf32, #tpu.memory_space<vmem>>, vector<16x16xf32>
      %cst_39 = arith.constant 2.500000e-01 : f32
      %31 = vector.broadcast %cst_39 : f32 to vector<16x16xf32>
      %32 = arith.mulf %30, %31 : vector<16x16xf32>
      %c0_40 = arith.constant 0 : index
      %c1 = arith.constant 1 : index
      %c1_41 = arith.constant 1 : index
      %33 = vector.load %arg7[%c0_40, %c1, %c1_41] : memref<2x18x18xf32, #tpu.memory_space<vmem>>, vector<1x16x16xf32>
      %34 = vector.shape_cast %33 : vector<1x16x16xf32> to vector<16x16xf32>
      %35 = vector.shape_cast %32 : vector<16x16xf32> to vector<1x16x16xf32>
      tpu.vector_store %arg7[%c0_40, %c1, %c1_41], %35 {strides = array<i32>} : memref<2x18x18xf32, #tpu.memory_space<vmem>>, vector<1x16x16xf32>,
      %c0_42 = arith.constant 0 : index
      %c0_43 = arith.constant 0 : index
      %36 = vector.load %arg6[%c0_42, %c0_43] : memref<16x16xf32, #tpu.memory_space<vmem>>, vector<16x16xf32>
      %c1_44 = arith.constant 1 : index
      %c1_45 = arith.constant 1 : index
      %c1_46 = arith.constant 1 : index
      %37 = vector.load %arg7[%c1_44, %c1_45, %c1_46] : memref<2x18x18xf32, #tpu.memory_space<vmem>>, vector<1x16x16xf32>
      %38 = vector.shape_cast %37 : vector<1x16x16xf32> to vector<16x16xf32>
      %39 = vector.shape_cast %36 : vector<16x16xf32> to vector<1x16x16xf32>
      tpu.vector_store %arg7[%c1_44, %c1_45, %c1_46], %39 {strides = array<i32>} : memref<2x18x18xf32, #tpu.memory_space<vmem>>, vector<1x16x16xf32>,
      %cst_47 = arith.constant 0.000000e+00 : f32
      %40 = vector.broadcast %cst_47 : f32 to vector<16x16xf32>
      %c0_48 = arith.constant 0 : index
      %c0_49 = arith.constant 0 : index
      %c0_50 = arith.constant 0 : index
      %41 = vector.load %arg7[%c0_48, %c0_49, %c0_50] : memref<2x18x18xf32, #tpu.memory_space<vmem>>, vector<1x16x18xf32>
      %42 = vector.shape_cast %41 : vector<1x16x18xf32> to vector<16x18xf32>
      %43 = vector.extract_strided_slice %42 {offsets = [0, 0], sizes = [16, 16], strides = [1, 1]} : vector<16x18xf32> to vector<16x16xf32>
      %c0_51 = arith.constant 0 : index
      %44 = memref.load %arg3[%c0_51] : memref<18xf32, #tpu.memory_space<smem>>
      %45 = vector.broadcast %44 : f32 to vector<16x16xf32>
      %46 = arith.mulf %43, %45 : vector<16x16xf32>
      %47 = arith.addf %40, %46 : vector<16x16xf32>
      %48 = vector.extract_strided_slice %42 {offsets = [0, 1], sizes = [16, 16], strides = [1, 1]} : vector<16x18xf32> to vector<16x16xf32>
      %c1_52 = arith.constant 1 : index
      %49 = memref.load %arg3[%c1_52] : memref<18xf32, #tpu.memory_space<smem>>
      %50 = vector.broadcast %49 : f32 to vector<16x16xf32>
      %51 = arith.mulf %48, %50 : vector<16x16xf32>
      %52 = arith.addf %47, %51 : vector<16x16xf32>
      %53 = vector.extract_strided_slice %42 {offsets = [0, 2], sizes = [16, 16], strides = [1, 1]} : vector<16x18xf32> to vector<16x16xf32>
      %c2 = arith.constant 2 : index
      %54 = memref.load %arg3[%c2] : memref<18xf32, #tpu.memory_space<smem>>
      %55 = vector.broadcast %54 : f32 to vector<16x16xf32>
      %56 = arith.mulf %53, %55 : vector<16x16xf32>
      %57 = arith.addf %52, %56 : vector<16x16xf32>
      %c0_53 = arith.constant 0 : index
      %c1_54 = arith.constant 1 : index
      %c0_55 = arith.constant 0 : index
      %58 = vector.load %arg7[%c0_53, %c1_54, %c0_55] : memref<2x18x18xf32, #tpu.memory_space<vmem>>, vector<1x16x18xf32>
      %59 = vector.shape_cast %58 : vector<1x16x18xf32> to vector<16x18xf32>
      %60 = vector.extract_strided_slice %59 {offsets = [0, 0], sizes = [16, 16], strides = [1, 1]} : vector<16x18xf32> to vector<16x16xf32>
      %c3 = arith.constant 3 : index
      %61 = memref.load %arg3[%c3] : memref<18xf32, #tpu.memory_space<smem>>
      %62 = vector.broadcast %61 : f32 to vector<16x16xf32>
      %63 = arith.mulf %60, %62 : vector<16x16xf32>
      %64 = arith.addf %57, %63 : vector<16x16xf32>
      %65 = vector.extract_strided_slice %59 {offsets = [0, 1], sizes = [16, 16], strides = [1, 1]} : vector<16x18xf32> to vector<16x16xf32>
      %c4 = arith.constant 4 : index
      %66 = memref.load %arg3[%c4] : memref<18xf32, #tpu.memory_space<smem>>
      %67 = vector.broadcast %66 : f32 to vector<16x16xf32>
      %68 = arith.mulf %65, %67 : vector<16x16xf32>
      %69 = arith.addf %64, %68 : vector<16x16xf32>
      %70 = vector.extract_strided_slice %59 {offsets = [0, 2], sizes = [16, 16], strides = [1, 1]} : vector<16x18xf32> to vector<16x16xf32>
      %c5 = arith.constant 5 : index
      %71 = memref.load %arg3[%c5] : memref<18xf32, #tpu.memory_space<smem>>
      %72 = vector.broadcast %71 : f32 to vector<16x16xf32>
      %73 = arith.mulf %70, %72 : vector<16x16xf32>
      %74 = arith.addf %69, %73 : vector<16x16xf32>
      %c0_56 = arith.constant 0 : index
      %c2_57 = arith.constant 2 : index
      %c0_58 = arith.constant 0 : index
      %75 = vector.load %arg7[%c0_56, %c2_57, %c0_58] : memref<2x18x18xf32, #tpu.memory_space<vmem>>, vector<1x16x18xf32>
      %76 = vector.shape_cast %75 : vector<1x16x18xf32> to vector<16x18xf32>
      %77 = vector.extract_strided_slice %76 {offsets = [0, 0], sizes = [16, 16], strides = [1, 1]} : vector<16x18xf32> to vector<16x16xf32>
      %c6 = arith.constant 6 : index
      %78 = memref.load %arg3[%c6] : memref<18xf32, #tpu.memory_space<smem>>
      %79 = vector.broadcast %78 : f32 to vector<16x16xf32>
      %80 = arith.mulf %77, %79 : vector<16x16xf32>
      %81 = arith.addf %74, %80 : vector<16x16xf32>
      %82 = vector.extract_strided_slice %76 {offsets = [0, 1], sizes = [16, 16], strides = [1, 1]} : vector<16x18xf32> to vector<16x16xf32>
      %c7 = arith.constant 7 : index
      %83 = memref.load %arg3[%c7] : memref<18xf32, #tpu.memory_space<smem>>
      %84 = vector.broadcast %83 : f32 to vector<16x16xf32>
      %85 = arith.mulf %82, %84 : vector<16x16xf32>
      %86 = arith.addf %81, %85 : vector<16x16xf32>
      %87 = vector.extract_strided_slice %76 {offsets = [0, 2], sizes = [16, 16], strides = [1, 1]} : vector<16x18xf32> to vector<16x16xf32>
      %c8 = arith.constant 8 : index
      %88 = memref.load %arg3[%c8] : memref<18xf32, #tpu.memory_space<smem>>
      %89 = vector.broadcast %88 : f32 to vector<16x16xf32>
      %90 = arith.mulf %87, %89 : vector<16x16xf32>
      %91 = arith.addf %86, %90 : vector<16x16xf32>
      %c1_59 = arith.constant 1 : index
      %c0_60 = arith.constant 0 : index
      %c0_61 = arith.constant 0 : index
      %92 = vector.load %arg7[%c1_59, %c0_60, %c0_61] : memref<2x18x18xf32, #tpu.memory_space<vmem>>, vector<1x16x18xf32>
      %93 = vector.shape_cast %92 : vector<1x16x18xf32> to vector<16x18xf32>
      %94 = vector.extract_strided_slice %93 {offsets = [0, 0], sizes = [16, 16], strides = [1, 1]} : vector<16x18xf32> to vector<16x16xf32>
      %c9 = arith.constant 9 : index
      %95 = memref.load %arg3[%c9] : memref<18xf32, #tpu.memory_space<smem>>
      %96 = vector.broadcast %95 : f32 to vector<16x16xf32>
      %97 = arith.mulf %94, %96 : vector<16x16xf32>
      %98 = arith.addf %91, %97 : vector<16x16xf32>
      %99 = vector.extract_strided_slice %93 {offsets = [0, 1], sizes = [16, 16], strides = [1, 1]} : vector<16x18xf32> to vector<16x16xf32>
      %c10 = arith.constant 10 : index
      %100 = memref.load %arg3[%c10] : memref<18xf32, #tpu.memory_space<smem>>
      %101 = vector.broadcast %100 : f32 to vector<16x16xf32>
      %102 = arith.mulf %99, %101 : vector<16x16xf32>
      %103 = arith.addf %98, %102 : vector<16x16xf32>
      %104 = vector.extract_strided_slice %93 {offsets = [0, 2], sizes = [16, 16], strides = [1, 1]} : vector<16x18xf32> to vector<16x16xf32>
      %c11 = arith.constant 11 : index
      %105 = memref.load %arg3[%c11] : memref<18xf32, #tpu.memory_space<smem>>
      %106 = vector.broadcast %105 : f32 to vector<16x16xf32>
      %107 = arith.mulf %104, %106 : vector<16x16xf32>
      %108 = arith.addf %103, %107 : vector<16x16xf32>
      %c1_62 = arith.constant 1 : index
      %c1_63 = arith.constant 1 : index
      %c0_64 = arith.constant 0 : index
      %109 = vector.load %arg7[%c1_62, %c1_63, %c0_64] : memref<2x18x18xf32, #tpu.memory_space<vmem>>, vector<1x16x18xf32>
      %110 = vector.shape_cast %109 : vector<1x16x18xf32> to vector<16x18xf32>
      %111 = vector.extract_strided_slice %110 {offsets = [0, 0], sizes = [16, 16], strides = [1, 1]} : vector<16x18xf32> to vector<16x16xf32>
      %c12 = arith.constant 12 : index
      %112 = memref.load %arg3[%c12] : memref<18xf32, #tpu.memory_space<smem>>
      %113 = vector.broadcast %112 : f32 to vector<16x16xf32>
      %114 = arith.mulf %111, %113 : vector<16x16xf32>
      %115 = arith.addf %108, %114 : vector<16x16xf32>
      %116 = vector.extract_strided_slice %110 {offsets = [0, 1], sizes = [16, 16], strides = [1, 1]} : vector<16x18xf32> to vector<16x16xf32>
      %c13 = arith.constant 13 : index
      %117 = memref.load %arg3[%c13] : memref<18xf32, #tpu.memory_space<smem>>
      %118 = vector.broadcast %117 : f32 to vector<16x16xf32>
      %119 = arith.mulf %116, %118 : vector<16x16xf32>
      %120 = arith.addf %115, %119 : vector<16x16xf32>
      %121 = vector.extract_strided_slice %110 {offsets = [0, 2], sizes = [16, 16], strides = [1, 1]} : vector<16x18xf32> to vector<16x16xf32>
      %c14 = arith.constant 14 : index
      %122 = memref.load %arg3[%c14] : memref<18xf32, #tpu.memory_space<smem>>
      %123 = vector.broadcast %122 : f32 to vector<16x16xf32>
      %124 = arith.mulf %121, %123 : vector<16x16xf32>
      %125 = arith.addf %120, %124 : vector<16x16xf32>
      %c1_65 = arith.constant 1 : index
      %c2_66 = arith.constant 2 : index
      %c0_67 = arith.constant 0 : index
      %126 = vector.load %arg7[%c1_65, %c2_66, %c0_67] : memref<2x18x18xf32, #tpu.memory_space<vmem>>, vector<1x16x18xf32>
      %127 = vector.shape_cast %126 : vector<1x16x18xf32> to vector<16x18xf32>
      %128 = vector.extract_strided_slice %127 {offsets = [0, 0], sizes = [16, 16], strides = [1, 1]} : vector<16x18xf32> to vector<16x16xf32>
      %c15 = arith.constant 15 : index
      %129 = memref.load %arg3[%c15] : memref<18xf32, #tpu.memory_space<smem>>
      %130 = vector.broadcast %129 : f32 to vector<16x16xf32>
      %131 = arith.mulf %128, %130 : vector<16x16xf32>
      %132 = arith.addf %125, %131 : vector<16x16xf32>
      %133 = vector.extract_strided_slice %127 {offsets = [0, 1], sizes = [16, 16], strides = [1, 1]} : vector<16x18xf32> to vector<16x16xf32>
      %c16 = arith.constant 16 : index
      %134 = memref.load %arg3[%c16] : memref<18xf32, #tpu.memory_space<smem>>
      %135 = vector.broadcast %134 : f32 to vector<16x16xf32>
      %136 = arith.mulf %133, %135 : vector<16x16xf32>
      %137 = arith.addf %132, %136 : vector<16x16xf32>
      %138 = vector.extract_strided_slice %127 {offsets = [0, 2], sizes = [16, 16], strides = [1, 1]} : vector<16x18xf32> to vector<16x16xf32>
      %c17_68 = arith.constant 17 : index
      %139 = memref.load %arg3[%c17_68] : memref<18xf32, #tpu.memory_space<smem>>
      %140 = vector.broadcast %139 : f32 to vector<16x16xf32>
      %141 = arith.mulf %138, %140 : vector<16x16xf32>
      %142 = arith.addf %137, %141 : vector<16x16xf32>
      %c0_69 = arith.constant 0 : index
      %c0_70 = arith.constant 0 : index
      %c0_71 = arith.constant 0 : index
      %c0_72 = arith.constant 0 : index
      %143 = vector.load %arg4[%c0_69, %c0_70, %c0_71, %c0_72] : memref<1x1x16x16xf32, #tpu.memory_space<vmem>>, vector<1x1x16x16xf32>
      %144 = vector.shape_cast %143 : vector<1x1x16x16xf32> to vector<16x16xf32>
      %145 = vector.shape_cast %142 : vector<16x16xf32> to vector<1x1x16x16xf32>
      tpu.vector_store %arg4[%c0_69, %c0_70, %c0_71, %c0_72], %145 {strides = array<i32>} : memref<1x1x16x16xf32, #tpu.memory_space<vmem>>, vector<1x1x16x16xf32>,
    } else {
    }
    return
  }
  func.func @transform_0(%arg0: i32, %arg1: i32) -> (i32, i32, i32, i32) {
    %c0_i32 = arith.constant 0 : i32
    %c0_i32_0 = arith.constant 0 : i32
    %c0_i32_1 = arith.constant 0 : i32
    return %arg0, %arg1, %c0_i32, %c0_i32_0 : i32, i32, i32, i32
  }
  func.func @transform_1(%arg0: i32, %arg1: i32) -> i32 {
    %c0_i32 = arith.constant 0 : i32
    %c0_i32_0 = arith.constant 0 : i32
    return %c0_i32 : i32
  }
  func.func @transform_2(%arg0: i32, %arg1: i32) -> (i32, i32, i32, i32) {
    %c0_i32 = arith.constant 0 : i32
    %c0_i32_0 = arith.constant 0 : i32
    %c0_i32_1 = arith.constant 0 : i32
    %c0_i32_2 = arith.constant 0 : i32
    return %arg0, %c0_i32, %c0_i32_0, %c0_i32_1 : i32, i32, i32, i32
  }
}

</mosaic_0001>

<llo_original>
// kernel: spatial_attention_forward.1
$region0: #{spatial_attention_forward.1}
  #allocation0 [shape = 'u32[]', space=smem, size = 0x4, offset = 0x4, fixed_abs, tag = 'smem constant byte address 0x4 - core index']
  #allocation1 [shape = 'u32[144,128]{1,0:T(1,128)}', space=vmem, size = 0x12000, scoped, tag = 'internal scratch']
  #allocation2 [shape = 'f32[16,16]{1,0:T(8,128)}', space=vmem, size = 0x2000, scoped, tag = 'scratch operand']
  #allocation3 [shape = 'f32[16,16]{1,0:T(8,128)}', space=vmem, size = 0x2000, scoped, tag = 'scratch operand']
  #allocation4 [shape = 'f32[2,18,18]{2,1,0:T(8,128)}', space=vmem, size = 0x6000, scoped, tag = 'scratch operand']
  %s0 = inlined_call_operand.hbm [shape: f32[2,4,16,16], index: 0, kind: input, shape index: {}]
  %s1 = inlined_call_operand.vmem [shape: f32[18], index: 1, kind: input, shape index: {}]
  %s2 = inlined_call_operand.hbm [shape: f32[2,1,16,16], index: 2, kind: output, shape index: {}]
  %s3 = sld [smem:[#allocation0]]
  $region57: #{spatial_attention_forward.1} parent=0
    _
  %s5 = ssub.s32 1, %s3
  %s6 = scalar_select 0, %s5, %s3
  $region1: #{spatial_attention_forward.1} parent=0
    #allocation5 [shape = 'u8[32768]{0}', space=vmem, size = 0x8000, scoped, tag = 'input window, operand 0']
    #allocation6 [shape = 's32[2]{0}', space=sflag, size = 0x8, scoped, tag = 'scoped memory for spatial_attention_forward.1']
    #allocation7 [shape = 's32[2]{0}', space=sflag, size = 0x8, scoped, tag = 'scoped memory for spatial_attention_forward.1']
    #allocation8 [shape = 's32[2]{0}', space=sflag, size = 0x8, scoped, tag = 'scoped memory for spatial_attention_forward.1']
    #allocation9 [shape = 'u8[512]{0}', space=smem, size = 0x200, scoped, tag = 'input window, operand 1, single buffered']
    #allocation10 [shape = 'u8[16384]{0}', space=vmem, size = 0x4000, scoped, tag = 'output window, operand 0']
    %7 = vsyncpa [#allocation6], 0
    %s8 = scalar_lea.sflag [#allocation6], 1
    %9 = vsyncpa %s8, 0
    %10 = vsyncpa [#allocation8], 0
    %11 = vsyncpa [#allocation7], 0
    %s12 = scalar_lea.sflag [#allocation7], 1
    %13 = vsyncpa %s12, 0
    loop: start=0, step=1, limit=6
    $region2: #{spatial_attention_forward.1} parent=1 // loop_pre_header
      _
    $region3: #{spatial_attention_forward.1} parent=1 // loop_header
      %s15 = sphi 0, %s19
      %p16 = scmp.ge.s32.totalorder %s15, 6
      %s22 = sphi 0, %s34
      %s23 = sphi 0, %s30
      %s24 = sphi 0, %s22
      %s25 = sphi 0, %s23
      %s26 = sphi 0, %s24
      %s27 = sphi 0, %s25
      %s39 = sphi 0, %s41
      %s42 = sphi 0, %s39
      %s43 = sphi 0, %s42
      %s59 = sphi 0, %s43
      %s63 = sphi 0, %s63
      %s65 = sphi 0, %s63
      %s66 = sphi 0, %s65
      %s80 = sphi 0, %s66
      %s86 = sphi 0, %s88
      %s89 = sphi 0, %s86
      %s90 = sphi 0, %s89
      %s106 = sphi 0, %s90
    $region4: #{spatial_attention_forward.1} parent=1 // loop_header_branch
      %18 = sbr.rel (%p16) target = $region8
    $region5: #{spatial_attention_forward.1} parent=1 // loop_body
      %s20 = ssub.s32 %s15, 1
      %s21 = ssub.s32 %s15, 2
      %s28 = sadd.s32 1, %s23
      %p29 = scmp.ge.s32.totalorder %s28, 2
      %s30 = scalar_select %p29, 0, %s28
      %s31 = sadd.s32 1, %s22
      %s32 = scalar_select %p29, %s31, %s22
      %p33 = scmp.ge.s32.totalorder %s32, 2
      %s34 = scalar_select %p33, 0, %s32
      %s35 = ssub.s32 %s22, %s34
      %s36 = ssub.s32 %s23, %s30
      %s37 = sor.u32 %s35, %s36
      %p38 = scmp.eq.s32.totalorder %s37, 0
      %s40 = sadd.s32 %s39, 1
      %s41 = scalar_select %p38, %s39, %s40
      %p44 = pneg %p38
      %p45 = scmp.eq.s32.totalorder %s15, 3
      %p46 = por %p44, %p45
      %p47 = scmp.ne.s32.totalorder %s39, %s42
      %p48 = scmp.eq.s32.totalorder %s15, 0
      %p49 = por %p47, %p48
      %p50 = scmp.ne.s32.totalorder %s39, %s42
      %p51 = scmp.eq.s32.totalorder %s20, 3
      %p52 = por %p50, %p51
      %p53 = scmp.ne.s32.totalorder %s42, %s43
      %p54 = scmp.eq.s32.totalorder %s20, 0
      %p55 = por %p53, %p54
      %p56 = scmp.ne.s32.totalorder %s42, %s43
      %p57 = scmp.eq.s32.totalorder %s21, 3
      %p58 = por %p56, %p57
      %p60 = scmp.ne.s32.totalorder %s43, %s59
      %p61 = scmp.eq.s32.totalorder %s21, 0
      %p62 = por %p60, %p61
      %s64 = sadd.s32 %s63, 1
      %p67 = scmp.eq.s32.totalorder %s15, 3
      %p68 = scmp.ne.s32.totalorder %s63, %s65
      %p69 = scmp.eq.s32.totalorder %s15, 0
      %p70 = por %p68, %p69
      %p71 = scmp.ne.s32.totalorder %s63, %s65
      %p72 = scmp.eq.s32.totalorder %s20, 3
      %p73 = por %p71, %p72
      %p74 = scmp.ne.s32.totalorder %s65, %s66
      %p75 = scmp.eq.s32.totalorder %s20, 0
      %p76 = por %p74, %p75
      %p77 = scmp.ne.s32.totalorder %s65, %s66
      %p78 = scmp.eq.s32.totalorder %s21, 3
      %p79 = por %p77, %p78
      %p81 = scmp.ne.s32.totalorder %s66, %s80
      %p82 = scmp.eq.s32.totalorder %s21, 0
      %p83 = por %p81, %p82
      %s84 = ssub.s32 %s22, %s34
      %p85 = scmp.eq.s32.totalorder %s84, 0
      %s87 = sadd.s32 %s86, 1
      %s88 = scalar_select %p85, %s86, %s87
      %p91 = pneg %p85
      %p92 = scmp.eq.s32.totalorder %s15, 3
      %p93 = por %p91, %p92
      %p94 = scmp.ne.s32.totalorder %s86, %s89
      %p95 = scmp.eq.s32.totalorder %s15, 0
      %p96 = por %p94, %p95
      %p97 = scmp.ne.s32.totalorder %s86, %s89
      %p98 = scmp.eq.s32.totalorder %s20, 3
      %p99 = por %p97, %p98
      %p100 = scmp.ne.s32.totalorder %s89, %s90
      %p101 = scmp.eq.s32.totalorder %s20, 0
      %p102 = por %p100, %p101
      %p103 = scmp.ne.s32.totalorder %s89, %s90
      %p104 = scmp.eq.s32.totalorder %s21, 3
      %p105 = por %p103, %p104
      %p107 = scmp.ne.s32.totalorder %s90, %s106
      %p108 = scmp.eq.s32.totalorder %s21, 0
      %p109 = por %p107, %p108
      %p110 = scmp.le.s32.totalorder 1, %s15
      %p111 = scmp.lt.s32.totalorder %s15, 5
      %p112 = pnand %p110, %p111
      %p113 = pneg %p112
      // Predicated region
      $region9: #{spatial_attention_forward.1} parent=5 // pred_check
        _
      $region10: #{spatial_attention_forward.1} parent=5 // pred_check_branch
        %115 = sbr.rel (%p112) target = $region12
      $region11: #{spatial_attention_forward.1} parent=5 // pred_region
        %s116 = ssub.s32 %s15, 1
        // Predicated region
        $region13: #{spatial_attention_forward.1} parent=11 // pred_check
          %p117 = pneg %p76
        $region14: #{spatial_attention_forward.1} parent=11 // pred_check_branch
          %119 = sbr.rel (%p117) target = $region16
        $region15: #{spatial_attention_forward.1} parent=11 // pred_region
          %s121 = ssub.s32 16, 16
          %122 = vsyncadd [#allocation8], %s121
          %s124 = sshll.u32 %s1, 4
          %s125 = int_to_ptr.vmem [resolvable:$true] %s124
          %127 = dma.vmem_to_smem %s125, 16, [#allocation9], [#allocation8]
        $region16: #{spatial_attention_forward.1} parent=11 // pred_fallthru
          _
      $region12: #{spatial_attention_forward.1} parent=5 // pred_fallthru
        _
      %p128 = scmp.lt.s32.totalorder %s15, 4
      // Predicated region
      $region17: #{spatial_attention_forward.1} parent=5 // pred_check
        %p129 = pneg %p128
      $region18: #{spatial_attention_forward.1} parent=5 // pred_check_branch
        %131 = sbr.rel (%p129) target = $region20
      $region19: #{spatial_attention_forward.1} parent=5 // pred_region
        // Predicated region
        $region21: #{spatial_attention_forward.1} parent=19 // pred_check
          %p132 = pneg %p49
        $region22: #{spatial_attention_forward.1} parent=19 // pred_check_branch
          %134 = sbr.rel (%p132) target = $region24
        $region23: #{spatial_attention_forward.1} parent=19 // pred_region
          %s135 = sand.u32 %s39, 1
          %s136 = scalar_lea.sflag [#allocation6], %s135
          %s137 = sand.u32 %s39, 1
          %s138 = smul.addr %s137, 32
          %s139 = scalar_lea.vmem [#allocation5], %s138
          %s140 = smul.u32 2, %s23
          %s142 = ssub.s32 512, 512
          %143 = vsyncadd %s136, %s142
          %s144 = smul.addr %s140, 2
          %s145 = smul.addr %s22, 8
          %s146 = sadd.s32 %s144, %s145
          %s147 = smul.addr %s146, 128
          %s148 = scalar_lea.hbm %s0, %s147
          %s149 = sshll.u32 %s139, 4
          %s150 = int_to_ptr.vmem [resolvable:$true] %s149
          %155 = dma.hbm_to_vmem [thread:$0]  %s148, 512, %s150, %s136, 128, 128, 8
        $region24: #{spatial_attention_forward.1} parent=19 // pred_fallthru
          _
      $region20: #{spatial_attention_forward.1} parent=5 // pred_fallthru
        _
      %p156 = scmp.le.s32.totalorder 1, %s15
      %p157 = scmp.lt.s32.totalorder %s15, 5
      %p158 = pnand %p156, %p157
      %p159 = pneg %p158
      // Predicated region
      $region25: #{spatial_attention_forward.1} parent=5 // pred_check
        _
      $region26: #{spatial_attention_forward.1} parent=5 // pred_check_branch
        %161 = sbr.rel (%p158) target = $region28
      $region27: #{spatial_attention_forward.1} parent=5 // pred_region
        %s162 = ssub.s32 %s15, 1
        %s163 = sand.u32 %s42, 1
        %s164 = scalar_lea.sflag [#allocation6], %s163
        %s165 = sand.u32 %s42, 1
        %s166 = smul.addr %s165, 32
        %s167 = scalar_lea.vmem [#allocation5], %s166
        // Predicated region
        $region29: #{spatial_attention_forward.1} parent=27 // pred_check
          %p168 = pneg %p55
        $region30: #{spatial_attention_forward.1} parent=27 // pred_check_branch
          %170 = sbr.rel (%p168) target = $region32
        $region31: #{spatial_attention_forward.1} parent=27 // pred_region
          %171 = dma.done %s164, 512
        $region32: #{spatial_attention_forward.1} parent=27 // pred_fallthru
          _
        // Predicated region
        $region33: #{spatial_attention_forward.1} parent=27 // pred_check
          %p172 = pneg %p76
        $region34: #{spatial_attention_forward.1} parent=27 // pred_check_branch
          %174 = sbr.rel (%p172) target = $region36
        $region35: #{spatial_attention_forward.1} parent=27 // pred_region
          %175 = dma.done [#allocation8], 16
        $region36: #{spatial_attention_forward.1} parent=27 // pred_fallthru
          _
        %176 = sfence
        %s177 = sand.u32 %s42, 1
        %s178 = scalar_lea.sflag [#allocation6], %s177
        %s179 = sand.u32 %s42, 1
        %s180 = smul.addr %s179, 32
        %s181 = scalar_lea.vmem [#allocation5], %s180
        %p182 = pneg %p55
        %p183 = pneg %p52
        %p184 = pneg %p76
        %p185 = pneg %p73
        %p186 = pneg %p102
        %p187 = pneg %p99
        %s188 = sand.u32 %s89, 1
        %s189 = scalar_lea.sflag [#allocation7], %s188
        %s190 = sand.u32 %s89, 1
        %s191 = smul.addr %s190, 16
        %s192 = scalar_lea.vmem [#allocation10], %s191
        %s193 = smul.u32 2, %s25
        %p194 = scmp.eq.s32.totalorder %s25, 0
        // Predicated region
        $region37: #{spatial_attention_forward.1} parent=27 // pred_check
          %p195 = pneg %p194
        $region38: #{spatial_attention_forward.1} parent=27 // pred_check_branch
          %197 = sbr.rel (%p195) target = $region40
        $region39: #{spatial_attention_forward.1} parent=27 // pred_region
          %vm198 = vcmask 130048
          %199 = vst.msk [vmem:[#allocation2] sm:$0xff] %vm198, 0.0
          %200 = vst.msk [vmem:[#allocation2 + $0x8] sm:$0xff] %vm198, 0.0
          %201 = vst.msk [vmem:[#allocation3] sm:$0xff] %vm198, -inf
          %202 = vst.msk [vmem:[#allocation3 + $0x8] sm:$0xff] %vm198, -inf
        $region40: #{spatial_attention_forward.1} parent=27 // pred_fallthru
          _
        %v203 = vld [vmem:[%s167] sm:$0xff]
        %v204 = vld [vmem:[%s167 + $0x8] sm:$0xff]
        %v205 = vld [vmem:[#allocation2] sm:$0xff]
        %v206 = vld [vmem:[#allocation2 + $0x8] sm:$0xff]
        %v207 = vadd.f32 %v205, %v203
        %v208 = vadd.f32 %v206, %v204
        %vm209 = vcmask 130048
        %210 = vst.msk [vmem:[#allocation2] sm:$0xff] %vm209, %v207
        %211 = vst.msk [vmem:[#allocation2 + $0x8] sm:$0xff] %vm209, %v208
        %v212 = vld [vmem:[#allocation3] sm:$0xff]
        %v213 = vld [vmem:[#allocation3 + $0x8] sm:$0xff]
        %v214 = vmax.f32 %v212, %v203
        %v215 = vmax.f32 %v213, %v204
        %216 = vst.msk [vmem:[#allocation3] sm:$0xff] %vm209, %v214
        %217 = vst.msk [vmem:[#allocation3 + $0x8] sm:$0xff] %vm209, %v215
        %s218 = scalar_lea.vmem %s167, 16 [#allocation5]
        %v219 = vld [vmem:[%s218] sm:$0xff]
        %v220 = vld [vmem:[%s218 + $0x8] sm:$0xff]
        %v221 = vld [vmem:[#allocation2] sm:$0xff]
        %v222 = vld [vmem:[#allocation2 + $0x8] sm:$0xff]
        %v223 = vadd.f32 %v221, %v219
        %v224 = vadd.f32 %v222, %v220
        %225 = vst.msk [vmem:[#allocation2] sm:$0xff] %vm209, %v223
        %226 = vst.msk [vmem:[#allocation2 + $0x8] sm:$0xff] %vm209, %v224
        %v227 = vld [vmem:[#allocation3] sm:$0xff]
        %v228 = vld [vmem:[#allocation3 + $0x8] sm:$0xff]
        %v229 = vmax.f32 %v227, %v219
        %v230 = vmax.f32 %v228, %v220
        %231 = vst.msk [vmem:[#allocation3] sm:$0xff] %vm209, %v229
        %232 = vst.msk [vmem:[#allocation3 + $0x8] sm:$0xff] %vm209, %v230
        %p233 = scmp.eq.s32.totalorder %s25, 1
        // Predicated region
        $region41: #{spatial_attention_forward.1} parent=27 // pred_check
          %p234 = pneg %p233
        $region42: #{spatial_attention_forward.1} parent=27 // pred_check_branch
          %236 = sbr.rel (%p234) target = $region44
        $region43: #{spatial_attention_forward.1} parent=27 // pred_region
          %vm237 = vcmask 139264
          %238 = vst.msk [vmem:[#allocation4] sm:$0x1] %vm237, 0.0
          %239 = vst.msk [vmem:[#allocation4 + $0x18] sm:$0x1] %vm237, 0.0
          %240 = vst.msk [vmem:[#allocation4 + $0x11] sm:$0x1] %vm237, 0.0
          %241 = vst.msk [vmem:[#allocation4 + $0x29] sm:$0x1] %vm237, 0.0
          %vm242 = vcmask 7168
          %243 = vst.msk [vmem:[#allocation4] sm:$0xff] %vm242, 0.0
          %244 = vst.msk [vmem:[#allocation4 + $0x8] sm:$0xff] %vm242, 0.0
          %vm245 = vcmask 1024
          %246 = vst.msk [vmem:[#allocation4 + $0x10] sm:$0x3] %vm245, 0.0
          %247 = vst.msk [vmem:[#allocation4 + $0x18] sm:$0xff] %vm242, 0.0
          %248 = vst.msk [vmem:[#allocation4 + $0x20] sm:$0xff] %vm242, 0.0
          %249 = vst.msk [vmem:[#allocation4 + $0x28] sm:$0x3] %vm245, 0.0
          %vm250 = vcmask 146568
          %251 = vst.msk [vmem:[#allocation4] sm:$0xff] %vm250, 0.0
          %252 = vst.msk [vmem:[#allocation4 + $0x8] sm:$0xff] %vm250, 0.0
          %vm253 = vcmask 140424
          %254 = vst.msk [vmem:[#allocation4 + $0x10] sm:$0x3] %vm253, 0.0
          %255 = vst.msk [vmem:[#allocation4 + $0x18] sm:$0xff] %vm250, 0.0
          %256 = vst.msk [vmem:[#allocation4 + $0x20] sm:$0xff] %vm250, 0.0
          %257 = vst.msk [vmem:[#allocation4 + $0x28] sm:$0x3] %vm253, 0.0
          %v258 = vld [vmem:[#allocation2] sm:$0xff]
          %v259 = vld [vmem:[#allocation2 + $0x8] sm:$0xff]
          %v260 = vmul.f32 %v258, 0.25
          %v261 = vmul.f32 %v259, 0.25
          %264 = vrot.lane.b32.xlu0 %v260, 1
          %v265 = vpop.permute.xlu0 %264
          %266 = vrot.lane.b32.xlu0 %v261, 1
          %v267 = vpop.permute.xlu0 %266
          %vm270 = vcmask 138248
          %271 = vst.msk [vmem:[#allocation4 + $0x1] sm:$0xff] %vm270, %v265
          %272 = vst.msk [vmem:[#allocation4 + $0x9] sm:$0xff] %vm270, %v267
          %v273 = vld [vmem:[#allocation3] sm:$0xff]
          %v274 = vld [vmem:[#allocation3 + $0x8] sm:$0xff]
          %277 = vrot.lane.b32.xlu0 %v273, 1
          %v278 = vpop.permute.xlu0 %277
          %279 = vrot.lane.b32.xlu0 %v274, 1
          %v280 = vpop.permute.xlu0 %279
          %s283 = scalar_lea.vmem [#allocation4], 24
          %284 = vst.msk [vmem:[%s283 + $0x1] sm:$0xff] %vm270, %v278
          %285 = vst.msk [vmem:[%s283 + $0x9] sm:$0xff] %vm270, %v280
          %v286 = vld [vmem:[#allocation4] sm:$0xff]
          %v287 = vld [vmem:[#allocation4 + $0x8] sm:$0xff]
          %s288 = sld [smem:[#allocation9]]
          %v289 = vstv %s288
          %v290 = vmul.f32 %v286, %v289
          %v291 = vmul.f32 %v287, %v289
          %v292 = vadd.f32 %v290, 0.0
          %v293 = vadd.f32 %v291, 0.0
          %s294 = sld [smem:[#allocation9 + $0x1]]
          %v295 = vstv %s294
          %v296 = vmul.f32 %v286, %v295
          %v297 = vmul.f32 %v287, %v295
          %300 = vrot.lane.b32.xlu0 %v296, 127
          %v301 = vpop.permute.xlu0 %300
          %302 = vrot.lane.b32.xlu0 %v297, 127
          %v303 = vpop.permute.xlu0 %302
          %v306 = vadd.f32 %v292, %v301
          %v307 = vadd.f32 %v293, %v303
          %s308 = sld [smem:[#allocation9 + $0x2]]
          %v309 = vstv %s308
          %v310 = vmul.f32 %v286, %v309
          %v311 = vmul.f32 %v287, %v309
          %314 = vrot.lane.b32.xlu0 %v310, 126
          %v315 = vpop.permute.xlu0 %314
          %316 = vrot.lane.b32.xlu0 %v311, 126
          %v317 = vpop.permute.xlu0 %316
          %v320 = vadd.f32 %v306, %v315
          %v321 = vadd.f32 %v307, %v317
          %v322 = vld [vmem:[#allocation4 + $0x1] sm:$0xff]
          %v323 = vld [vmem:[#allocation4 + $0x9] sm:$0xff]
          %s324 = sld [smem:[#allocation9 + $0x3]]
          %v325 = vstv %s324
          %v326 = vmul.f32 %v322, %v325
          %v327 = vmul.f32 %v323, %v325
          %v328 = vadd.f32 %v320, %v326
          %v329 = vadd.f32 %v321, %v327
          %s330 = sld [smem:[#allocation9 + $0x4]]
          %v331 = vstv %s330
          %v332 = vmul.f32 %v322, %v331
          %v333 = vmul.f32 %v323, %v331
          %336 = vrot.lane.b32.xlu0 %v332, 127
          %v337 = vpop.permute.xlu0 %336
          %338 = vrot.lane.b32.xlu0 %v333, 127
          %v339 = vpop.permute.xlu0 %338
          %v342 = vadd.f32 %v328, %v337
          %v343 = vadd.f32 %v329, %v339
          %s344 = sld [smem:[#allocation9 + $0x5]]
          %v345 = vstv %s344
          %v346 = vmul.f32 %v322, %v345
          %v347 = vmul.f32 %v323, %v345
          %350 = vrot.lane.b32.xlu0 %v346, 126
          %v351 = vpop.permute.xlu0 %350
          %352 = vrot.lane.b32.xlu0 %v347, 126
          %v353 = vpop.permute.xlu0 %352
          %v356 = vadd.f32 %v342, %v351
          %v357 = vadd.f32 %v343, %v353
          %v358 = vld [vmem:[#allocation4 + $0x2] sm:$0xff]
          %v359 = vld [vmem:[#allocation4 + $0xa] sm:$0xff]
          %s360 = sld [smem:[#allocation9 + $0x6]]
          %v361 = vstv %s360
          %v362 = vmul.f32 %v358, %v361
          %v363 = vmul.f32 %v359, %v361
          %v364 = vadd.f32 %v356, %v362
          %v365 = vadd.f32 %v357, %v363
          %s366 = sld [smem:[#allocation9 + $0x7]]
          %v367 = vstv %s366
          %v368 = vmul.f32 %v358, %v367
          %v369 = vmul.f32 %v359, %v367
          %372 = vrot.lane.b32.xlu0 %v368, 127
          %v373 = vpop.permute.xlu0 %372
          %374 = vrot.lane.b32.xlu0 %v369, 127
          %v375 = vpop.permute.xlu0 %374
          %v378 = vadd.f32 %v364, %v373
          %v379 = vadd.f32 %v365, %v375
          %s380 = sld [smem:[#allocation9 + $0x8]]
          %v381 = vstv %s380
          %v382 = vmul.f32 %v358, %v381
          %v383 = vmul.f32 %v359, %v381
          %386 = vrot.lane.b32.xlu0 %v382, 126
          %v387 = vpop.permute.xlu0 %386
          %388 = vrot.lane.b32.xlu0 %v383, 126
          %v389 = vpop.permute.xlu0 %388
          %v392 = vadd.f32 %v378, %v387
          %v393 = vadd.f32 %v379, %v389
          %v394 = vld [vmem:[%s283] sm:$0xff]
          %v395 = vld [vmem:[%s283 + $0x8] sm:$0xff]
          %s396 = sld [smem:[#allocation9 + $0x9]]
          %v397 = vstv %s396
          %v398 = vmul.f32 %v394, %v397
          %v399 = vmul.f32 %v395, %v397
          %v400 = vadd.f32 %v392, %v398
          %v401 = vadd.f32 %v393, %v399
          %s402 = sld [smem:[#allocation9 + $0xa]]
          %v403 = vstv %s402
          %v404 = vmul.f32 %v394, %v403
          %v405 = vmul.f32 %v395, %v403
          %408 = vrot.lane.b32.xlu0 %v404, 127
          %v409 = vpop.permute.xlu0 %408
          %410 = vrot.lane.b32.xlu0 %v405, 127
          %v411 = vpop.permute.xlu0 %410
          %v414 = vadd.f32 %v400, %v409
          %v415 = vadd.f32 %v401, %v411
          %s416 = sld [smem:[#allocation9 + $0xb]]
          %v417 = vstv %s416
          %v418 = vmul.f32 %v394, %v417
          %v419 = vmul.f32 %v395, %v417
          %422 = vrot.lane.b32.xlu0 %v418, 126
          %v423 = vpop.permute.xlu0 %422
          %424 = vrot.lane.b32.xlu0 %v419, 126
          %v425 = vpop.permute.xlu0 %424
          %v428 = vadd.f32 %v414, %v423
          %v429 = vadd.f32 %v415, %v425
          %v430 = vld [vmem:[%s283 + $0x1] sm:$0xff]
          %v431 = vld [vmem:[%s283 + $0x9] sm:$0xff]
          %s432 = sld [smem:[#allocation9 + $0xc]]
          %v433 = vstv %s432
          %v434 = vmul.f32 %v430, %v433
          %v435 = vmul.f32 %v431, %v433
          %v436 = vadd.f32 %v428, %v434
          %v437 = vadd.f32 %v429, %v435
          %s438 = sld [smem:[#allocation9 + $0xd]]
          %v439 = vstv %s438
          %v440 = vmul.f32 %v430, %v439
          %v441 = vmul.f32 %v431, %v439
          %444 = vrot.lane.b32.xlu0 %v440, 127
          %v445 = vpop.permute.xlu0 %444
          %446 = vrot.lane.b32.xlu0 %v441, 127
          %v447 = vpop.permute.xlu0 %446
          %v450 = vadd.f32 %v436, %v445
          %v451 = vadd.f32 %v437, %v447
          %s452 = sld [smem:[#allocation9 + $0xe]]
          %v453 = vstv %s452
          %v454 = vmul.f32 %v430, %v453
          %v455 = vmul.f32 %v431, %v453
          %458 = vrot.lane.b32.xlu0 %v454, 126
          %v459 = vpop.permute.xlu0 %458
          %460 = vrot.lane.b32.xlu0 %v455, 126
          %v461 = vpop.permute.xlu0 %460
          %v464 = vadd.f32 %v450, %v459
          %v465 = vadd.f32 %v451, %v461
          %v466 = vld [vmem:[%s283 + $0x2] sm:$0xff]
          %v467 = vld [vmem:[%s283 + $0xa] sm:$0xff]
          %s468 = sld [smem:[#allocation9 + $0xf]]
          %v469 = vstv %s468
          %v470 = vmul.f32 %v466, %v469
          %v471 = vmul.f32 %v467, %v469
          %v472 = vadd.f32 %v464, %v470
          %v473 = vadd.f32 %v465, %v471
          %s474 = sld [smem:[#allocation9 + $0x10]]
          %v475 = vstv %s474
          %v476 = vmul.f32 %v466, %v475
          %v477 = vmul.f32 %v467, %v475
          %480 = vrot.lane.b32.xlu0 %v476, 127
          %v481 = vpop.permute.xlu0 %480
          %482 = vrot.lane.b32.xlu0 %v477, 127
          %v483 = vpop.permute.xlu0 %482
          %v486 = vadd.f32 %v472, %v481
          %v487 = vadd.f32 %v473, %v483
          %s488 = sld [smem:[#allocation9 + $0x11]]
          %v489 = vstv %s488
          %v490 = vmul.f32 %v466, %v489
          %v491 = vmul.f32 %v467, %v489
          %494 = vrot.lane.b32.xlu0 %v490, 126
          %v495 = vpop.permute.xlu0 %494
          %496 = vrot.lane.b32.xlu0 %v491, 126
          %v497 = vpop.permute.xlu0 %496
          %v500 = vadd.f32 %v486, %v495
          %v501 = vadd.f32 %v487, %v497
          %502 = vst.msk [vmem:[%s192] sm:$0xff] %vm209, %v500
          %503 = vst.msk [vmem:[%s192 + $0x8] sm:$0xff] %vm209, %v501
        $region44: #{spatial_attention_forward.1} parent=27 // pred_fallthru
          _
        %s504 = sand.u32 %s89, 1
        %s505 = scalar_lea.sflag [#allocation7], %s504
        %s506 = sand.u32 %s89, 1
        %s507 = smul.addr %s506, 16
        %s508 = scalar_lea.vmem [#allocation10], %s507
        // Predicated region
        $region45: #{spatial_attention_forward.1} parent=27 // pred_check
          %p509 = pneg %p99
        $region46: #{spatial_attention_forward.1} parent=27 // pred_check_branch
          %511 = sbr.rel (%p509) target = $region48
        $region47: #{spatial_attention_forward.1} parent=27 // pred_region
          %s513 = ssub.s32 256, 256
          %514 = vsyncadd %s505, %s513
          %s515 = smul.addr %s24, 2
          %s516 = smul.addr %s515, 128
          %s517 = scalar_lea.hbm %s2, %s516
          %s518 = sshll.u32 %s508, 4
          %s519 = int_to_ptr.vmem [resolvable:$true] %s518
          %524 = dma.vmem_to_hbm [thread:$0]  %s519, 256, %s517, %s505, 128, 128, 8
        $region48: #{spatial_attention_forward.1} parent=27 // pred_fallthru
          _
      $region28: #{spatial_attention_forward.1} parent=5 // pred_fallthru
        _
      %p525 = scmp.le.s32.totalorder 2, %s15
      // Predicated region
      $region49: #{spatial_attention_forward.1} parent=5 // pred_check
        %p526 = pneg %p525
      $region50: #{spatial_attention_forward.1} parent=5 // pred_check_branch
        %528 = sbr.rel (%p526) target = $region52
      $region51: #{spatial_attention_forward.1} parent=5 // pred_region
        %s529 = ssub.s32 %s15, 2
        // Predicated region
        $region53: #{spatial_attention_forward.1} parent=51 // pred_check
          %p530 = pneg %p105
        $region54: #{spatial_attention_forward.1} parent=51 // pred_check_branch
          %532 = sbr.rel (%p530) target = $region56
        $region55: #{spatial_attention_forward.1} parent=51 // pred_region
          %s533 = sand.u32 %s90, 1
          %s534 = scalar_lea.sflag [#allocation7], %s533
          %s535 = sand.u32 %s90, 1
          %s536 = smul.addr %s535, 16
          %s537 = scalar_lea.vmem [#allocation10], %s536
          %538 = dma.done %s534, 256
        $region56: #{spatial_attention_forward.1} parent=51 // pred_fallthru
          _
      $region52: #{spatial_attention_forward.1} parent=5 // pred_fallthru
        _
    $region6: #{spatial_attention_forward.1} parent=1 // loop_footer
      %s19 = sadd.s32 1, %s15
    $region7: #{spatial_attention_forward.1} parent=1 // loop_footer_branch
      %14 = sbr.rel target = $region3
    $region8: #{spatial_attention_forward.1} parent=1 // loop_exit
      _
    %539 = vsyncpa [#allocation6], 1
    %s540 = scalar_lea.sflag [#allocation6], 1
    %541 = vsyncpa %s540, 1
    %542 = vsyncpa [#allocation7], 1
    %s543 = scalar_lea.sflag [#allocation7], 1
    %544 = vsyncpa %s543, 1
    %545 = vsyncpa [#allocation8], 1
    %s546 = scalar_lea.sflag [#allocation8], 1
    %547 = vsyncpa %s546, 1

</llo_original>
